<compile_context>
chip_gen: v6e
topology: v6e:2x2x1
jax: 0.10.0
libtpu: 0.0.40
codegen_flags: <defaults>
</compile_context>

<pallas_src>
import jax
import jax.numpy as jnp
from jax.experimental import pallas as pl
from jax.experimental.pallas import tpu as pltpu

_LANE = 128
_SUBLANE = 8
_TARGET_BLOCK_BYTES = 2 * 1024 * 1024  # ~2 MiB/block; in+out double-buffered ≈ 8 MiB VMEM


# ---------------------------------------------------------------------------
# Kernels
# ---------------------------------------------------------------------------
def _copy_kernel(x_ref, o_ref):
    # lane-dense (ts, tc) slab copy through VMEM
    o_ref[...] = x_ref[...]


def _last_slice_kernel(x_ref, o_ref):
    # x_ref block is (1, tb, H) pinned at the last seq index
    o_ref[...] = x_ref[0]


# ---------------------------------------------------------------------------
# Tiling helpers
# ---------------------------------------------------------------------------
def _pick_copy_tiles(S, BH, itemsize):
    """Pick (ts, tc) for a (S, BH) copy.

    Every chosen dim is either a multiple of (8, 128) or equals the full array
    dim, so the BlockSpec is always legal; partial edge blocks are masked by Pallas.
    """
    if BH <= _LANE:
        tc = BH  # full lane extent (legal even when < 128)
    else:
        max_lane = max(_LANE, _TARGET_BLOCK_BYTES // (_SUBLANE * itemsize))
        tc = min(BH, (max_lane // _LANE) * _LANE)  # multiple of 128, or full BH
    rows = max(
        _SUBLANE,
        (_TARGET_BLOCK_BYTES // max(tc * itemsize, 1)) // _SUBLANE * _SUBLANE,
    )
    ts = S if S < _SUBLANE else min(rows, S)  # multiple of 8, or full S
    return ts, tc


# ---------------------------------------------------------------------------
# Wrappers
# ---------------------------------------------------------------------------
def _streamed_copy(embeds):
    """Materialized identity copy (only when a fresh buffer is truly required)."""
    S, B, H = embeds.shape
    BH = B * H
    ts, tc = _pick_copy_tiles(S, BH, embeds.dtype.itemsize)

    x2d = embeds.reshape(S, BH)  # contiguous -> metadata-only reshape
    out2d = pl.pallas_call(
        _copy_kernel,
        out_shape=jax.ShapeDtypeStruct((S, BH), embeds.dtype),
        grid_spec=pltpu.PrefetchScalarGridSpec(
            num_scalar_prefetch=0,
            grid=(pl.cdiv(S, ts), pl.cdiv(BH, tc)),
            in_specs=[pl.BlockSpec((ts, tc), lambda i, j: (i, j))],
            out_specs=pl.BlockSpec((ts, tc), lambda i, j: (i, j)),
        ),
        compiler_params=pltpu.CompilerParams(
            dimension_semantics=("parallel", "parallel"),
        ),
    )(x2d)
    return out2d.reshape(S, B, H)


def _last_slice(embeds):
    """embeds[-1] via a batch-tiled Pallas copy pinned to seq index S-1."""
    S, B, H = embeds.shape
    itemsize = embeds.dtype.itemsize
    row_bytes = max(H * itemsize, 1)
    tb = max(_SUBLANE, (_TARGET_BLOCK_BYTES // row_bytes) // _SUBLANE * _SUBLANE)
    tb = B if B < _SUBLANE else min(tb, B)  # multiple of 8, or full B

    return pl.pallas_call(
        _last_slice_kernel,
        out_shape=jax.ShapeDtypeStruct((B, H), embeds.dtype),
        grid_spec=pltpu.PrefetchScalarGridSpec(
            num_scalar_prefetch=0,
            grid=(pl.cdiv(B, tb),),
            # Input block pinned at the last seq index: only row S-1 is DMA'd.
            in_specs=[pl.BlockSpec((1, tb, H), lambda j: (S - 1, j, 0))],
            out_specs=pl.BlockSpec((tb, H), lambda j: (j, 0)),
        ),
        compiler_params=pltpu.CompilerParams(
            dimension_semantics=("parallel",),
        ),
    )(embeds)


def pooler_forward(embeds, pooler="ocp", materialize=False):
    """Pallas implementation of Pooler.forward.

    embeds: jnp.ndarray of shape [seq, batch, hidden]
    pooler: 'ocp' -> identity; anything else -> embeds[-1]
    materialize: if True on the 'ocp' path, return a fresh copy streamed through
                 an optimized Pallas copy kernel instead of the input array.
    """
    if pooler == "ocp":
        if materialize:
            return _streamed_copy(embeds)
        # Identity: PyTorch returns the same tensor — don't burn 2x HBM BW on a copy.
        return embeds
    return _last_slice(embeds)


# ---------------------------------------------------------------------------
# Main
# ---------------------------------------------------------------------------
if __name__ == "__main__":
    key = jax.random.PRNGKey(0)
    S, B, H = 8, 2, 32  # seq=8, batch=2, hidden=32
    embeds = jax.random.normal(key, (S, B, H), dtype=jnp.float32)

    # pooler == 'ocp' : identity (no kernel, zero-cost)
    out_ocp = jax.block_until_ready(pooler_forward(embeds, pooler="ocp"))
    assert out_ocp.shape == (S, B, H)
    assert jnp.allclose(out_ocp, embeds)

    # pooler == 'ocp' with a materialized copy (tiled streaming Pallas kernel)
    out_copy = jax.block_until_ready(
        pooler_forward(embeds, pooler="ocp", materialize=True))
    assert out_copy.shape == (S, B, H)
    assert jnp.allclose(out_copy, embeds)

    # pooler != 'ocp' : last slice along seq axis (batch-tiled Pallas kernel)
    out_last = jax.block_until_ready(pooler_forward(embeds, pooler="last"))
    assert out_last.shape == (B, H)
    assert jnp.allclose(out_last, embeds[-1])

    print("KERNEL_OK")
</pallas_src>

<mosaic_0001>
module attributes {stable_mosaic.version = 11 : i64} {
  func.func @_copy_kernel(%arg0: i32, %arg1: i32, %arg2: memref<8x64xf32, #tpu.memory_space<vmem>>, %arg3: memref<8x64xf32, #tpu.memory_space<vmem>>) attributes {dimension_semantics = [#tpu.dimension_semantics<parallel>, #tpu.dimension_semantics<parallel>], iteration_bounds = array<i64: 1, 1>, scalar_prefetch = 0 : i64, scratch_operands = 0 : i64, tpu.core_type = #tpu.core_type<tc>, window_params = [{transform_indices = @transform_0, window_bounds = array<i64: 8, 64>}, {transform_indices = @transform_1, window_bounds = array<i64: 8, 64>}]} {
    %c0 = arith.constant 0 : index
    %c0_0 = arith.constant 0 : index
    %0 = vector.load %arg2[%c0, %c0_0] : memref<8x64xf32, #tpu.memory_space<vmem>>, vector<8x64xf32>
    %c0_1 = arith.constant 0 : index
    %c0_2 = arith.constant 0 : index
    %1 = vector.load %arg3[%c0_1, %c0_2] : memref<8x64xf32, #tpu.memory_space<vmem>>, vector<8x64xf32>
    tpu.vector_store %arg3[%c0_1, %c0_2], %0 {strides = array<i32>} : memref<8x64xf32, #tpu.memory_space<vmem>>, vector<8x64xf32>,
    return
  }
  func.func @transform_0(%arg0: i32, %arg1: i32) -> (i32, i32) {
    %c0_i32 = arith.constant 0 : i32
    return %arg0, %arg1 : i32, i32
  }
  func.func @transform_1(%arg0: i32, %arg1: i32) -> (i32, i32) {
    %c0_i32 = arith.constant 0 : i32
    return %arg0, %arg1 : i32, i32
  }
}

</mosaic_0001>

<llo_original>
// kernel: tpu_custom_call.1
$region0: #{tpu_custom_call.1}
  #allocation0 [shape = 'u32[]', space=smem, size = 0x4, offset = 0x4, fixed_abs, tag = 'smem constant byte address 0x4 - core index']
  #allocation1 [shape = 'u32[144,128]{1,0:T(1,128)}', space=vmem, size = 0x12000, scoped, tag = 'internal scratch']
  %s0 = inlined_call_operand.hbm [shape: f32[8,64], index: 0, kind: input, shape index: {}]
  %s1 = inlined_call_operand.hbm [shape: f32[8,64], index: 1, kind: output, shape index: {}]
  %s2 = sld [smem:[#allocation0]]
  $region18: #{tpu_custom_call.1} parent=0
    _
  %s4 = ssub.s32 1, %s2
  %s5 = scalar_select 0, %s4, %s2
  $region1: #{tpu_custom_call.1} parent=0
    #allocation2 [shape = 'u8[4096]{0}', space=vmem, size = 0x1000, scoped, tag = 'input window, operand 0, single buffered']
    #allocation3 [shape = 's32[1]{0}', space=sflag, size = 0x4, scoped, tag = 'scoped memory for tpu_custom_call.1']
    #allocation4 [shape = 's32[1]{0}', space=sflag, size = 0x4, scoped, tag = 'scoped memory for tpu_custom_call.1']
    #allocation5 [shape = 'u8[4096]{0}', space=vmem, size = 0x1000, scoped, tag = 'output window, operand 0, single buffered']
    %6 = vsyncpa [#allocation3], 0
    %7 = vsyncpa [#allocation4], 0
    // Predicated region
    $region2: #{tpu_custom_call.1} parent=1 // pred_check
      _
    $region3: #{tpu_custom_call.1} parent=1 // pred_check_branch
      %9 = sbr.rel (0) target = $region5
    $region4: #{tpu_custom_call.1} parent=1 // pred_region
      %s11 = ssub.s32 128, 128
      %12 = vsyncadd [#allocation3], %s11
      %s14 = sshll.u32 [#allocation2], 4
      %s15 = int_to_ptr.vmem [resolvable:$true] %s14
      %17 = dma.hbm_to_vmem [thread:$0]  %s0, 128, %s15, [#allocation3]
    $region5: #{tpu_custom_call.1} parent=1 // pred_fallthru
      _
    // Predicated region
    $region6: #{tpu_custom_call.1} parent=1 // pred_check
      _
    $region7: #{tpu_custom_call.1} parent=1 // pred_check_branch
      %19 = sbr.rel (0) target = $region9
    $region8: #{tpu_custom_call.1} parent=1 // pred_region
      %20 = dma.done [#allocation3], 128
    $region9: #{tpu_custom_call.1} parent=1 // pred_fallthru
      _
    %v21 = vld [vmem:[#allocation2] sm:$0xff]
    %vm22 = vcmask 523264
    %23 = vst.msk [vmem:[#allocation5] sm:$0xff] %vm22, %v21
    // Predicated region
    $region10: #{tpu_custom_call.1} parent=1 // pred_check
      _
    $region11: #{tpu_custom_call.1} parent=1 // pred_check_branch
      %25 = sbr.rel (0) target = $region13
    $region12: #{tpu_custom_call.1} parent=1 // pred_region
      %s27 = ssub.s32 128, 128
      %28 = vsyncadd [#allocation4], %s27
      %s30 = sshll.u32 [#allocation5], 4
      %s31 = int_to_ptr.vmem [resolvable:$true] %s30
      %33 = dma.vmem_to_hbm [thread:$0]  %s31, 128, %s1, [#allocation4]
    $region13: #{tpu_custom_call.1} parent=1 // pred_fallthru
      _
    // Predicated region
    $region14: #{tpu_custom_call.1} parent=1 // pred_check
      _
    $region15: #{tpu_custom_call.1} parent=1 // pred_check_branch
      %35 = sbr.rel (0) target = $region17
    $region16: #{tpu_custom_call.1} parent=1 // pred_region
      %36 = dma.done [#allocation4], 128
    $region17: #{tpu_custom_call.1} parent=1 // pred_fallthru
      _
    %37 = vsyncpa [#allocation3], 1
    %38 = vsyncpa [#allocation4], 1

</llo_original>
